<compile_context>
chip_gen: v6e
topology: v6e:2x2x1
jax: 0.10.0
libtpu: 0.0.40
codegen_flags: <defaults>
</compile_context>

<pallas_src>
import math

import jax
import jax.numpy as jnp
from jax.experimental import pallas as pl
from jax.experimental.pallas import tpu as pltpu


LANE = 128
TARGET_X_TILE_BYTES = 8 * 1024 * 1024    # >=4 MiB per step (review); 8 MiB ~ knee
MAX_PACKED_LANES = 8192                  # keep packed input rows a sane lane width
_FALLBACK_VMEM_CAP = 64 * 1024 * 1024    # v7x physical VMEM (most conservative)


# ---------------------------------------------------------------------------
# Parameter construction (mirrors ObservationFunction.__init__ for obs='h';
# the obs='z' branch uses Wr = eye(dim_z), i.e. make_Wr(dim_z, dim_z)).
# TODO(synk): the Wr='sparse' random-permutation branch is not constructed here
#             (any such Wr passed in is still handled by the generic matmul path).
# ---------------------------------------------------------------------------
def make_Wr(dim_y: int, dim_h: int) -> jnp.ndarray:
    if dim_y is None or dim_y == dim_h:
        return jnp.eye(dim_h, dtype=jnp.float32)
    assert dim_y < dim_h and dim_h % dim_y == 0
    rep = dim_h // dim_y
    # torch.repeat_interleave(torch.eye(dim_y), rep, dim=1) * (dim_y / dim_h)
    Wr = jnp.repeat(jnp.eye(dim_y, dtype=jnp.float32), rep, axis=1)
    return Wr * (dim_y / dim_h)  # (dim_y, dim_h)


def _vmem_capacity_bytes() -> int:
    try:
        return int(pltpu.get_tpu_info().vmem_capacity_bytes)
    except Exception:
        return _FALLBACK_VMEM_CAP


def _sublane_multiple(dtype) -> int:
    # f32 -> 8, bf16 -> 16, int8/fp8 -> 32  (dtype min-tile second-minor dim)
    return max(8, 32 // jnp.dtype(dtype).itemsize)


def _is_identity(Wr) -> bool:
    """Concrete, square Wr equal to eye -> projection is a no-op."""
    if Wr.shape[0] != Wr.shape[1]:
        return False
    if isinstance(Wr, jax.core.Tracer):
        return False
    n = Wr.shape[0]
    return bool(jnp.all(Wr == jnp.eye(n, dtype=Wr.dtype)))


def _grid_semantics():
    """CORE_PARALLEL on v7x (2 TCs per chip), plain 'parallel' elsewhere."""
    try:
        kind = jax.devices()[0].device_kind.lower()
    except Exception:
        kind = ""
    core_parallel = getattr(pltpu, "CORE_PARALLEL", None)
    if core_parallel is not None and ("v7" in kind or "7x" in kind):
        return (core_parallel,), True
    return ("parallel",), False


# ---------------------------------------------------------------------------
# Pallas kernel: one packed tile  out = x_tile @ W_big   (W_big resident)
# ---------------------------------------------------------------------------
def _obs_matmul_kernel(x_ref, w_ref, o_ref):
    o_ref[...] = jnp.dot(
        x_ref[...], w_ref[...], preferred_element_type=jnp.float32
    ).astype(o_ref.dtype)


def observation_forward(x: jnp.ndarray, Wr: jnp.ndarray) -> jnp.ndarray:
    """y = (Wr @ x[..., None]).squeeze(-1)  ==  x @ Wr.T  over leading dims."""
    dim_y, dim_h = Wr.shape
    assert x.shape[-1] == dim_h
    lead_shape = x.shape[:-1]

    # Identity fast path (obs='z', or obs='h' with dim_y == dim_h): y = x.
    if _is_identity(Wr):
        return x

    M = math.prod(lead_shape) if lead_shape else 1
    x_flat = x.reshape(M, dim_h)
    bpe = jnp.dtype(x.dtype).itemsize
    sub = _sublane_multiple(x.dtype)

    # ---- lane packing: P batch rows per slab row, chosen such that ----------
    #  * packed output rows are P*dim_y (=128 when possible) lanes wide
    #    -> dense, unmasked vst / dense HBM writeback,
    #  * packed input rows stay a sane lane width,
    #  * P divides M exactly -> NO wrapper-side jnp.pad (a pad would add a full
    #    extra HBM read+write of x, 2-3x slowdown for this mem-bound kernel).
    P = LANE // dim_y if (dim_y < LANE and LANE % dim_y == 0) else 1
    while P > 1 and (P * dim_h > MAX_PACKED_LANES or M % P != 0):
        P //= 2

    Mp = M // P
    x_packed = x_flat.reshape(Mp, P * dim_h)            # contiguous view -> free
    Kp, Np = P * dim_h, P * dim_y

    WrT = Wr.T.astype(x.dtype)                          # (dim_h, dim_y)
    W_big = jnp.kron(jnp.eye(P, dtype=x.dtype), WrT) if P > 1 else WrT
    w_bytes = bpe * Kp * Np

    # ---- byte-targeted M tiling under a per-generation VMEM budget ----------
    vmem_cap = _vmem_capacity_bytes()
    budget = min(int(vmem_cap * 0.6), 96 * 1024 * 1024)     # ~38 MiB v7x, ~77 MiB v5e/v6e
    tile = min(Mp, max(sub, TARGET_X_TILE_BYTES // max(1, bpe * Kp)))
    per_row_bytes = bpe * (Kp + Np)
    while tile > sub and (2 * tile * per_row_bytes + 2 * w_bytes) > budget:
        tile //= 2
    if tile < Mp:
        tile = max(sub, (tile // sub) * sub)    # dtype-aware sublane alignment
    else:
        tile = Mp                               # single full-extent block is always legal

    grid = (pl.cdiv(Mp, tile),)                 # partial last block handled by Pallas
    vmem_need = 2 * tile * per_row_bytes + 2 * w_bytes
    vmem_limit = int(min(0.9 * vmem_cap, max(2 * vmem_need, 32 * 1024 * 1024)))

    cost = pl.CostEstimate(
        flops=2 * Mp * Kp * Np,
        transcendentals=0,
        bytes_accessed=bpe * (Mp * Kp + Kp * Np + Mp * Np),
    )

    def _call(dim_sem):
        return pl.pallas_call(
            _obs_matmul_kernel,
            out_shape=jax.ShapeDtypeStruct((Mp, Np), x.dtype),
            grid=grid,
            in_specs=[
                pl.BlockSpec((tile, Kp), lambda i: (i, 0)),
                pl.BlockSpec((Kp, Np), lambda i: (0, 0)),   # resident weight block
            ],
            out_specs=pl.BlockSpec((tile, Np), lambda i: (i, 0)),
            compiler_params=pltpu.CompilerParams(
                dimension_semantics=dim_sem,
                vmem_limit_bytes=vmem_limit,
            ),
            cost_estimate=cost,
        )(x_packed, W_big)

    dim_sem, is_core_parallel = _grid_semantics()
    if is_core_parallel:
        try:
            out_packed = _call(dim_sem)          # split M across both v7x TCs
        except Exception:
            out_packed = _call(("parallel",))    # safe fallback
    else:
        out_packed = _call(dim_sem)

    y_flat = out_packed.reshape(M, dim_y)        # contiguous unpack -> free
    return y_flat.reshape(*lead_shape, dim_y)


def observation_function_forward(h, z, obs, Wr):
    """Mirror of ObservationFunction.forward."""
    if obs == 'h':
        return observation_forward(h, Wr)
    elif obs == 'z':
        return observation_forward(z, Wr)
    raise ValueError(f'Invalid input: ObservationFunction.obs={obs}')


if __name__ == "__main__":
    key = jax.random.PRNGKey(0)
    kh, kz, k2, k3 = jax.random.split(key, 4)

    # small shapes consistent with the module (obs='h' branch)
    batch, seq, dim_h, dim_y = 2, 8, 32, 8
    h = jax.random.normal(kh, (batch, seq, dim_h), dtype=jnp.float32)
    z = jax.random.normal(kz, (batch, seq, dim_h), dtype=jnp.float32)
    Wr = make_Wr(dim_y, dim_h)  # (dim_y, dim_h)

    # obs='h': packed MXU path (M=16 divisible by P=16 -> 128-lane dense output)
    y = jax.block_until_ready(observation_function_forward(h, z, 'h', Wr))
    y_ref = jnp.einsum("yh,bsh->bsy", Wr, h)
    assert y.shape == (batch, seq, dim_y)
    assert jnp.allclose(y, y_ref, atol=1e-5, rtol=1e-5)

    # ragged M: packing factor degrades (16 -> 4) instead of padding the slab
    M2 = 2052
    h2 = jax.random.normal(k2, (M2, dim_h), dtype=jnp.float32)
    y2 = jax.block_until_ready(observation_forward(h2, Wr))
    assert y2.shape == (M2, dim_y)
    assert jnp.allclose(y2, h2 @ Wr.T, atol=1e-5, rtol=1e-5)

    # odd M: falls back to the unpacked (P=1) streaming matmul, still no pad copy
    M3 = 515
    h3 = jax.random.normal(k3, (M3, dim_h), dtype=jnp.float32)
    y3 = jax.block_until_ready(observation_forward(h3, Wr))
    assert y3.shape == (M3, dim_y)
    assert jnp.allclose(y3, h3 @ Wr.T, atol=1e-5, rtol=1e-5)

    # obs='z' (Wr = eye(dim_z)): identity fast path, no pallas_call at all
    Wr_z = make_Wr(dim_h, dim_h)
    yz = jax.block_until_ready(observation_function_forward(h, z, 'z', Wr_z))
    assert jnp.allclose(yz, z)

    print("KERNEL_OK")
</pallas_src>

<mosaic_0001>
module attributes {stable_mosaic.version = 11 : i64} {
  func.func @_obs_matmul_kernel(%arg0: i32, %arg1: memref<1x512xf32, #tpu.memory_space<vmem>>, %arg2: memref<512x128xf32, #tpu.memory_space<vmem>>, %arg3: memref<1x128xf32, #tpu.memory_space<vmem>>) attributes {dimension_semantics = [#tpu.dimension_semantics<parallel>], iteration_bounds = array<i64: 1>, scalar_prefetch = 0 : i64, scratch_operands = 0 : i64, tpu.core_type = #tpu.core_type<tc>, window_params = [{transform_indices = @transform_0, window_bounds = array<i64: 1, 512>}, {pipeline_mode = #tpu.pipeline_mode<synchronous>, transform_indices = @transform_1, window_bounds = array<i64: 512, 128>}, {transform_indices = @transform_2, window_bounds = array<i64: 1, 128>}]} {
    %c0 = arith.constant 0 : index
    %c0_0 = arith.constant 0 : index
    %0 = vector.load %arg1[%c0, %c0_0] : memref<1x512xf32, #tpu.memory_space<vmem>>, vector<1x512xf32>
    %c0_1 = arith.constant 0 : index
    %c0_2 = arith.constant 0 : index
    %1 = vector.load %arg2[%c0_1, %c0_2] : memref<512x128xf32, #tpu.memory_space<vmem>>, vector<512x128xf32>
    %cst = arith.constant dense<0.000000e+00> : vector<1x128xf32>
    %2 = tpu.matmul %0, %1, %cst {dimension_numbers = #tpu.dot_dimension_numbers<[1], [0], [0], [1], [0, 0, 1, 1], [], []>} : vector<1x512xf32>, vector<512x128xf32>, vector<1x128xf32> -> vector<1x128xf32>
    %c0_3 = arith.constant 0 : index
    %c0_4 = arith.constant 0 : index
    %3 = vector.load %arg3[%c0_3, %c0_4] : memref<1x128xf32, #tpu.memory_space<vmem>>, vector<1x128xf32>
    tpu.vector_store %arg3[%c0_3, %c0_4], %2 {strides = array<i32>} : memref<1x128xf32, #tpu.memory_space<vmem>>, vector<1x128xf32>,
    return
  }
  func.func @transform_0(%arg0: i32) -> (i32, i32) {
    %c0_i32 = arith.constant 0 : i32
    %c0_i32_0 = arith.constant 0 : i32
    return %arg0, %c0_i32 : i32, i32
  }
  func.func @transform_1(%arg0: i32) -> (i32, i32) {
    %c0_i32 = arith.constant 0 : i32
    %c0_i32_0 = arith.constant 0 : i32
    %c0_i32_1 = arith.constant 0 : i32
    return %c0_i32, %c0_i32_0 : i32, i32
  }
  func.func @transform_2(%arg0: i32) -> (i32, i32) {
    %c0_i32 = arith.constant 0 : i32
    %c0_i32_0 = arith.constant 0 : i32
    return %arg0, %c0_i32 : i32, i32
  }
}

</mosaic_0001>

<llo_original>
// kernel: tpu_custom_call.1
$region0: #{tpu_custom_call.1}
  #allocation0 [shape = 'u32[]', space=smem, size = 0x4, offset = 0x4, fixed_abs, tag = 'smem constant byte address 0x4 - core index']
  #allocation1 [shape = 'u32[144,128]{1,0:T(1,128)}', space=vmem, size = 0x12000, scoped, tag = 'internal scratch']
  %s0 = inlined_call_operand.hbm [shape: f32[1,512], index: 0, kind: input, shape index: {}]
  %s1 = inlined_call_operand.hbm [shape: f32[512,128], index: 1, kind: input, shape index: {}]
  %s2 = inlined_call_operand.hbm [shape: f32[1,128], index: 2, kind: output, shape index: {}]
  %s3 = sld [smem:[#allocation0]]
  $region26: #{tpu_custom_call.1} parent=0
    _
  %s5 = ssub.s32 1, %s3
  %s6 = scalar_select 0, %s5, %s3
  $region1: #{tpu_custom_call.1} parent=0
    #allocation2 [shape = 'u8[2048]{0}', space=vmem, size = 0x800, scoped, tag = 'input window, operand 0, single buffered']
    #allocation3 [shape = 's32[1]{0}', space=sflag, size = 0x4, scoped, tag = 'scoped memory for tpu_custom_call.1']
    #allocation4 [shape = 's32[1]{0}', space=sflag, size = 0x4, scoped, tag = 'scoped memory for tpu_custom_call.1']
    #allocation5 [shape = 'u8[262144]{0}', space=vmem, size = 0x40000, scoped, tag = 'input window, operand 1, single buffered']
    #allocation6 [shape = 's32[1]{0}', space=sflag, size = 0x4, scoped, tag = 'scoped memory for tpu_custom_call.1']
    #allocation7 [shape = 'u8[512]{0}', space=vmem, size = 0x400, scoped, tag = 'output window, operand 0, single buffered']
    %7 = vsyncpa [#allocation3], 0
    %8 = vsyncpa [#allocation6], 0
    %9 = vsyncpa [#allocation4], 0
    // Predicated region
    $region2: #{tpu_custom_call.1} parent=1 // pred_check
      _
    $region3: #{tpu_custom_call.1} parent=1 // pred_check_branch
      %11 = sbr.rel (0) target = $region5
    $region4: #{tpu_custom_call.1} parent=1 // pred_region
      %s13 = ssub.s32 64, 64
      %14 = vsyncadd [#allocation3], %s13
      %s16 = sshll.u32 [#allocation2], 4
      %s17 = int_to_ptr.vmem [resolvable:$true] %s16
      %19 = dma.hbm_to_vmem [thread:$0]  %s0, 64, %s17, [#allocation3]
    $region5: #{tpu_custom_call.1} parent=1 // pred_fallthru
      _
    // Predicated region
    $region6: #{tpu_custom_call.1} parent=1 // pred_check
      _
    $region7: #{tpu_custom_call.1} parent=1 // pred_check_branch
      %21 = sbr.rel (0) target = $region9
    $region8: #{tpu_custom_call.1} parent=1 // pred_region
      %s23 = ssub.s32 8192, 8192
      %24 = vsyncadd [#allocation6], %s23
      %s25 = sshll.u32 [#allocation5], 4
      %s26 = int_to_ptr.vmem [resolvable:$true] %s25
      %31 = dma.hbm_to_vmem [thread:$0]  %s1, 8192, %s26, [#allocation6], 128, 128, 8
    $region9: #{tpu_custom_call.1} parent=1 // pred_fallthru
      _
    // Predicated region
    $region10: #{tpu_custom_call.1} parent=1 // pred_check
      _
    $region11: #{tpu_custom_call.1} parent=1 // pred_check_branch
      %33 = sbr.rel (0) target = $region13
    $region12: #{tpu_custom_call.1} parent=1 // pred_region
      %34 = dma.done [#allocation3], 64
    $region13: #{tpu_custom_call.1} parent=1 // pred_fallthru
      _
    // Predicated region
    $region14: #{tpu_custom_call.1} parent=1 // pred_check
      _
    $region15: #{tpu_custom_call.1} parent=1 // pred_check_branch
      %36 = sbr.rel (0) target = $region17
    $region16: #{tpu_custom_call.1} parent=1 // pred_region
      %37 = dma.done [#allocation6], 8192
    $region17: #{tpu_custom_call.1} parent=1 // pred_fallthru
      _
    %v38 = vld [vmem:[#allocation2] sm:$0xf]
    %v39 = vld [vmem:[#allocation5] sm:$0xff]
    %v40 = vld [vmem:[#allocation5 + $0x8] sm:$0xff]
    %v41 = vld [vmem:[#allocation5 + $0x10] sm:$0xff]
    %v42 = vld [vmem:[#allocation5 + $0x18] sm:$0xff]
    %v43 = vld [vmem:[#allocation5 + $0x20] sm:$0xff]
    %v44 = vld [vmem:[#allocation5 + $0x28] sm:$0xff]
    %v45 = vld [vmem:[#allocation5 + $0x30] sm:$0xff]
    %v46 = vld [vmem:[#allocation5 + $0x38] sm:$0xff]
    %v47 = vld [vmem:[#allocation5 + $0x40] sm:$0xff]
    %v48 = vld [vmem:[#allocation5 + $0x48] sm:$0xff]
    %v49 = vld [vmem:[#allocation5 + $0x50] sm:$0xff]
    %v50 = vld [vmem:[#allocation5 + $0x58] sm:$0xff]
    %v51 = vld [vmem:[#allocation5 + $0x60] sm:$0xff]
    %v52 = vld [vmem:[#allocation5 + $0x68] sm:$0xff]
    %v53 = vld [vmem:[#allocation5 + $0x70] sm:$0xff]
    %v54 = vld [vmem:[#allocation5 + $0x78] sm:$0xff]
    %v55 = vld [vmem:[#allocation5 + $0x80] sm:$0xff]
    %v56 = vld [vmem:[#allocation5 + $0x88] sm:$0xff]
    %v57 = vld [vmem:[#allocation5 + $0x90] sm:$0xff]
    %v58 = vld [vmem:[#allocation5 + $0x98] sm:$0xff]
    %v59 = vld [vmem:[#allocation5 + $0xa0] sm:$0xff]
    %v60 = vld [vmem:[#allocation5 + $0xa8] sm:$0xff]
    %v61 = vld [vmem:[#allocation5 + $0xb0] sm:$0xff]
    %v62 = vld [vmem:[#allocation5 + $0xb8] sm:$0xff]
    %v63 = vld [vmem:[#allocation5 + $0xc0] sm:$0xff]
    %v64 = vld [vmem:[#allocation5 + $0xc8] sm:$0xff]
    %v65 = vld [vmem:[#allocation5 + $0xd0] sm:$0xff]
    %v66 = vld [vmem:[#allocation5 + $0xd8] sm:$0xff]
    %v67 = vld [vmem:[#allocation5 + $0xe0] sm:$0xff]
    %v68 = vld [vmem:[#allocation5 + $0xe8] sm:$0xff]
    %v69 = vld [vmem:[#allocation5 + $0xf0] sm:$0xff]
    %v70 = vld [vmem:[#allocation5 + $0xf8] sm:$0xff]
    %v71 = vld [vmem:[#allocation5 + $0x100] sm:$0xff]
    %v72 = vld [vmem:[#allocation5 + $0x108] sm:$0xff]
    %v73 = vld [vmem:[#allocation5 + $0x110] sm:$0xff]
    %v74 = vld [vmem:[#allocation5 + $0x118] sm:$0xff]
    %v75 = vld [vmem:[#allocation5 + $0x120] sm:$0xff]
    %v76 = vld [vmem:[#allocation5 + $0x128] sm:$0xff]
    %v77 = vld [vmem:[#allocation5 + $0x130] sm:$0xff]
    %v78 = vld [vmem:[#allocation5 + $0x138] sm:$0xff]
    %v79 = vld [vmem:[#allocation5 + $0x140] sm:$0xff]
    %v80 = vld [vmem:[#allocation5 + $0x148] sm:$0xff]
    %v81 = vld [vmem:[#allocation5 + $0x150] sm:$0xff]
    %v82 = vld [vmem:[#allocation5 + $0x158] sm:$0xff]
    %v83 = vld [vmem:[#allocation5 + $0x160] sm:$0xff]
    %v84 = vld [vmem:[#allocation5 + $0x168] sm:$0xff]
    %v85 = vld [vmem:[#allocation5 + $0x170] sm:$0xff]
    %v86 = vld [vmem:[#allocation5 + $0x178] sm:$0xff]
    %v87 = vld [vmem:[#allocation5 + $0x180] sm:$0xff]
    %v88 = vld [vmem:[#allocation5 + $0x188] sm:$0xff]
    %v89 = vld [vmem:[#allocation5 + $0x190] sm:$0xff]
    %v90 = vld [vmem:[#allocation5 + $0x198] sm:$0xff]
    %v91 = vld [vmem:[#allocation5 + $0x1a0] sm:$0xff]
    %v92 = vld [vmem:[#allocation5 + $0x1a8] sm:$0xff]
    %v93 = vld [vmem:[#allocation5 + $0x1b0] sm:$0xff]
    %v94 = vld [vmem:[#allocation5 + $0x1b8] sm:$0xff]
    %v95 = vld [vmem:[#allocation5 + $0x1c0] sm:$0xff]
    %v96 = vld [vmem:[#allocation5 + $0x1c8] sm:$0xff]
    %v97 = vld [vmem:[#allocation5 + $0x1d0] sm:$0xff]
    %v98 = vld [vmem:[#allocation5 + $0x1d8] sm:$0xff]
    %v99 = vld [vmem:[#allocation5 + $0x1e0] sm:$0xff]
    %v100 = vld [vmem:[#allocation5 + $0x1e8] sm:$0xff]
    %v101 = vld [vmem:[#allocation5 + $0x1f0] sm:$0xff]
    %v102 = vld [vmem:[#allocation5 + $0x1f8] sm:$0xff]
    %v104 = vlaneseq
    %v105 = vshrl.u32 %v104, 7
    %v106 = vsub.s32 0, %v105
    %v107 = vrot.slane %v38, %v106
    %v108 = vlaneseq
    %v109 = vshrl.u32 %v108, 7
    %v110 = vsub.s32 1, %v109
    %v111 = vrot.slane %v38, %v110
    %v112 = vlaneseq
    %v113 = vshrl.u32 %v112, 7
    %v114 = vsub.s32 2, %v113
    %v115 = vrot.slane %v38, %v114
    %v116 = vlaneseq
    %v117 = vshrl.u32 %v116, 7
    %v118 = vsub.s32 3, %v117
    %v119 = vrot.slane %v38, %v118
    %124 = vmatprep.subr.mxu0 0.0
    %125 = vmatpush1.msra.mxu0 %v54
    %126 = vmatprep.subr.mxu0 0.0
    %127 = vmatpush1.msra.mxu0 %v53
    %128 = vmatprep.subr.mxu0 0.0
    %129 = vmatpush1.msra.mxu0 %v52
    %130 = vmatprep.subr.mxu0 0.0
    %131 = vmatpush1.msra.mxu0 %v51
    %132 = vmatprep.subr.mxu0 0.0
    %133 = vmatpush1.msra.mxu0 %v50
    %134 = vmatprep.subr.mxu0 0.0
    %135 = vmatpush1.msra.mxu0 %v49
    %136 = vmatprep.subr.mxu0 0.0
    %137 = vmatpush1.msra.mxu0 %v48
    %138 = vmatprep.subr.mxu0 0.0
    %139 = vmatpush1.msra.mxu0 %v47
    %140 = vmatprep.subr.mxu0 0.0
    %141 = vmatpush1.msra.mxu0 %v46
    %142 = vmatprep.subr.mxu0 0.0
    %143 = vmatpush1.msra.mxu0 %v45
    %144 = vmatprep.subr.mxu0 0.0
    %145 = vmatpush1.msra.mxu0 %v44
    %146 = vmatprep.subr.mxu0 0.0
    %147 = vmatpush1.msra.mxu0 %v43
    %148 = vmatprep.subr.mxu0 0.0
    %149 = vmatpush1.msra.mxu0 %v42
    %150 = vmatprep.subr.mxu0 0.0
    %151 = vmatpush1.msra.mxu0 %v41
    %152 = vmatprep.subr.mxu0 0.0
    %153 = vmatpush1.msra.mxu0 %v40
    %154 = vmatprep.subr.mxu0 0.0
    %155 = vmatpush1.msra.mxu0 %v39
    %156 = vmatprep.subr.mxu0 0.0
    %157 = vmatpush2.msra.mxu0 %v70
    %158 = vmatprep.subr.mxu0 0.0
    %159 = vmatpush2.msra.mxu0 %v69
    %160 = vmatprep.subr.mxu0 0.0
    %161 = vmatpush2.msra.mxu0 %v68
    %162 = vmatprep.subr.mxu0 0.0
    %163 = vmatpush2.msra.mxu0 %v67
    %164 = vmatprep.subr.mxu0 0.0
    %165 = vmatpush2.msra.mxu0 %v66
    %166 = vmatprep.subr.mxu0 0.0
    %167 = vmatpush2.msra.mxu0 %v65
    %168 = vmatprep.subr.mxu0 0.0
    %169 = vmatpush2.msra.mxu0 %v64
    %170 = vmatprep.subr.mxu0 0.0
    %171 = vmatpush2.msra.mxu0 %v63
    %172 = vmatprep.subr.mxu0 0.0
    %173 = vmatpush2.msra.mxu0 %v62
    %174 = vmatprep.subr.mxu0 0.0
    %175 = vmatpush2.msra.mxu0 %v61
    %176 = vmatprep.subr.mxu0 0.0
    %177 = vmatpush2.msra.mxu0 %v60
    %178 = vmatprep.subr.mxu0 0.0
    %179 = vmatpush2.msra.mxu0 %v59
    %180 = vmatprep.subr.mxu0 0.0
    %181 = vmatpush2.msra.mxu0 %v58
    %182 = vmatprep.subr.mxu0 0.0
    %183 = vmatpush2.msra.mxu0 %v57
    %184 = vmatprep.subr.mxu0 0.0
    %185 = vmatpush2.msra.mxu0 %v56
    %186 = vmatprep.subr.mxu0 0.0
    %187 = vmatpush2.msra.mxu0 %v55
    %188 = vmatprep.mubr.f32.mxu0 %v111
    %189 = vmatmul.mubr.f32.gmra.mxu0 %v107
    %v190 = vpop.f32.mrf.mxu0
    %v191 = vadd.f32 0.0, %v190
    %v192 = vpop.f32.mrf.mxu0
    %193 = vdwg.mxu0
    %194 = vmatprep.subr.mxu0 0.0
    %195 = vmatpush1.msra.mxu0 %v86
    %196 = vmatprep.subr.mxu0 0.0
    %197 = vmatpush1.msra.mxu0 %v85
    %198 = vmatprep.subr.mxu0 0.0
    %199 = vmatpush1.msra.mxu0 %v84
    %200 = vmatprep.subr.mxu0 0.0
    %201 = vmatpush1.msra.mxu0 %v83
    %202 = vmatprep.subr.mxu0 0.0
    %203 = vmatpush1.msra.mxu0 %v82
    %204 = vmatprep.subr.mxu0 0.0
    %205 = vmatpush1.msra.mxu0 %v81
    %206 = vmatprep.subr.mxu0 0.0
    %207 = vmatpush1.msra.mxu0 %v80
    %208 = vmatprep.subr.mxu0 0.0
    %209 = vmatpush1.msra.mxu0 %v79
    %210 = vmatprep.subr.mxu0 0.0
    %211 = vmatpush1.msra.mxu0 %v78
    %212 = vmatprep.subr.mxu0 0.0
    %213 = vmatpush1.msra.mxu0 %v77
    %214 = vmatprep.subr.mxu0 0.0
    %215 = vmatpush1.msra.mxu0 %v76
    %216 = vmatprep.subr.mxu0 0.0
    %217 = vmatpush1.msra.mxu0 %v75
    %218 = vmatprep.subr.mxu0 0.0
    %219 = vmatpush1.msra.mxu0 %v74
    %220 = vmatprep.subr.mxu0 0.0
    %221 = vmatpush1.msra.mxu0 %v73
    %222 = vmatprep.subr.mxu0 0.0
    %223 = vmatpush1.msra.mxu0 %v72
    %224 = vmatprep.subr.mxu0 0.0
    %225 = vmatpush1.msra.mxu0 %v71
    %226 = vmatprep.subr.mxu0 0.0
    %227 = vmatpush2.msra.mxu0 %v102
    %228 = vmatprep.subr.mxu0 0.0
    %229 = vmatpush2.msra.mxu0 %v101
    %230 = vmatprep.subr.mxu0 0.0
    %231 = vmatpush2.msra.mxu0 %v100
    %232 = vmatprep.subr.mxu0 0.0
    %233 = vmatpush2.msra.mxu0 %v99
    %234 = vmatprep.subr.mxu0 0.0
    %235 = vmatpush2.msra.mxu0 %v98
    %236 = vmatprep.subr.mxu0 0.0
    %237 = vmatpush2.msra.mxu0 %v97
    %238 = vmatprep.subr.mxu0 0.0
    %239 = vmatpush2.msra.mxu0 %v96
    %240 = vmatprep.subr.mxu0 0.0
    %241 = vmatpush2.msra.mxu0 %v95
    %242 = vmatprep.subr.mxu0 0.0
    %243 = vmatpush2.msra.mxu0 %v94
    %244 = vmatprep.subr.mxu0 0.0
    %245 = vmatpush2.msra.mxu0 %v93
    %246 = vmatprep.subr.mxu0 0.0
    %247 = vmatpush2.msra.mxu0 %v92
    %248 = vmatprep.subr.mxu0 0.0
    %249 = vmatpush2.msra.mxu0 %v91
    %250 = vmatprep.subr.mxu0 0.0
    %251 = vmatpush2.msra.mxu0 %v90
    %252 = vmatprep.subr.mxu0 0.0
    %253 = vmatpush2.msra.mxu0 %v89
    %254 = vmatprep.subr.mxu0 0.0
    %255 = vmatpush2.msra.mxu0 %v88
    %256 = vmatprep.subr.mxu0 0.0
    %257 = vmatpush2.msra.mxu0 %v87
    %258 = vmatprep.mubr.f32.mxu0 %v119
    %259 = vmatmul.mubr.f32.gmra.mxu0 %v115
    %v260 = vpop.f32.mrf.mxu0
    %v261 = vadd.f32 %v191, %v260
    %v262 = vpop.f32.mrf.mxu0
    %263 = vdwg.mxu0
    %264 = vst [vmem:[#allocation7] sm:$0x1] %v261
    // Predicated region
    $region18: #{tpu_custom_call.1} parent=1 // pred_check
      _
    $region19: #{tpu_custom_call.1} parent=1 // pred_check_branch
      %266 = sbr.rel (0) target = $region21
    $region20: #{tpu_custom_call.1} parent=1 // pred_region
      %s268 = ssub.s32 16, 16
      %269 = vsyncadd [#allocation4], %s268
      %s271 = sshll.u32 [#allocation7], 4
      %s272 = int_to_ptr.vmem [resolvable:$true] %s271
      %274 = dma.vmem_to_hbm [thread:$0]  %s272, 16, %s2, [#allocation4]
    $region21: #{tpu_custom_call.1} parent=1 // pred_fallthru
      _
    // Predicated region
    $region22: #{tpu_custom_call.1} parent=1 // pred_check
      _
    $region23: #{tpu_custom_call.1} parent=1 // pred_check_branch
      %276 = sbr.rel (0) target = $region25
    $region24: #{tpu_custom_call.1} parent=1 // pred_region
      %277 = dma.done [#allocation4], 16
    $region25: #{tpu_custom_call.1} parent=1 // pred_fallthru
      _
    %278 = vsyncpa [#allocation3], 1
    %279 = vsyncpa [#allocation6], 1
    %280 = vsyncpa [#allocation4], 1

</llo_original>
